<compile_context>
chip_gen: v7x
topology: tpu7x:2x2x1
jax: 0.10.0
libtpu: 0.0.40
codegen_flags: <defaults>
</compile_context>

<pallas_src>
import functools

import jax
import jax.numpy as jnp
from jax.experimental import pallas as pl
from jax.experimental.pallas import tpu as pltpu

_LANE = 128  # vreg lane width: last dims must be multiples of this for dense stores


def _round_up(n, mult):
    return pl.cdiv(n, mult) * mult


def _mlp_kernel(x_ref, w1_ref, b1_ref, w2_ref, b2_ref, o_ref, *, approximate_gelu):
    # x_ref:(TM,Cin)  w1_ref:(Cin,H)  b1_ref:(1,H) f32
    # w2_ref:(H,Cout) b2_ref:(1,Cout) f32          o_ref:(TM,Cout)
    x = x_ref[...]
    h = jnp.dot(x, w1_ref[...], preferred_element_type=jnp.float32)
    h = h + b1_ref[...]  # bias-add in f32 on the f32 accumulator
    if approximate_gelu:
        # tanh-GELU: transcendental goes to the EUP (its own bundle slot).
        h = jax.nn.gelu(h, approximate=True)
    else:
        # exact erf-GELU (matches nn.GELU default)
        h = 0.5 * h * (1.0 + jax.lax.erf(h * 0.7071067811865476))
    # TODO(synk): nn.Dropout(p=0.0) is the identity; no RNG/masking needed.
    h = h.astype(w2_ref.dtype)  # back to MXU compute dtype for the 2nd matmul
    o = jnp.dot(h, w2_ref[...], preferred_element_type=jnp.float32)
    o = o + b2_ref[...]
    o_ref[...] = o.astype(o_ref.dtype)


def mlp_pallas(x, w1, b1, w2, b2, *, tile_m=256, compute_dtype=jnp.bfloat16,
               approximate_gelu=True):
    """x: (..., in_features). w1: (in, hidden), b1: (hidden,),
    w2: (hidden, out), b2: (out,). Returns (..., out_features) in x.dtype.

    Weights are held VMEM-resident via constant index_map; rows are tiled by
    tile_m; all feature dims are zero-padded to multiples of 128 so every
    MXU/VPU op and store is lane-dense. Zero padding is exact: padded input
    columns/hidden units contribute 0 (GELU(0) = 0) and padded output columns
    are sliced off.
    """
    orig_shape = x.shape
    out_dtype = x.dtype
    cin = orig_shape[-1]
    hidden = w1.shape[1]
    cout = w2.shape[1]

    x2 = x.reshape(-1, cin)
    m = x2.shape[0]

    cin_p = _round_up(cin, _LANE)
    hid_p = _round_up(hidden, _LANE)
    cout_p = _round_up(cout, _LANE)
    m_p = _round_up(m, tile_m)

    cdt = jnp.dtype(compute_dtype)
    x_p = jnp.pad(x2, ((0, m_p - m), (0, cin_p - cin))).astype(cdt)
    w1_p = jnp.pad(w1, ((0, cin_p - cin), (0, hid_p - hidden))).astype(cdt)
    w2_p = jnp.pad(w2, ((0, hid_p - hidden), (0, cout_p - cout))).astype(cdt)
    b1_p = jnp.pad(b1, (0, hid_p - hidden)).astype(jnp.float32).reshape(1, hid_p)
    b2_p = jnp.pad(b2, (0, cout_p - cout)).astype(jnp.float32).reshape(1, cout_p)

    # Explicit VMEM budget: BlockSpec double-buffers every operand (weights too,
    # despite the constant index_map), plus the f32 hidden activation. Capped at
    # 64 MiB so the same tile choice stays v7x-safe.
    w_bytes = (cin_p * hid_p + hid_p * cout_p) * cdt.itemsize + (hid_p + cout_p) * 4
    io_bytes = tile_m * (cin_p * cdt.itemsize + cout_p * jnp.dtype(out_dtype).itemsize)
    inter_bytes = tile_m * hid_p * 4
    vmem_limit = int(2 * (w_bytes + io_bytes) + 2 * inter_bytes + (4 << 20))
    vmem_limit = max(min(vmem_limit, 64 << 20), 32 << 20)

    grid = (m_p // tile_m,)
    out = pl.pallas_call(
        functools.partial(_mlp_kernel, approximate_gelu=approximate_gelu),
        out_shape=jax.ShapeDtypeStruct((m_p, cout_p), out_dtype),
        grid=grid,
        in_specs=[
            pl.BlockSpec((tile_m, cin_p), lambda i: (i, 0)),
            pl.BlockSpec((cin_p, hid_p), lambda i: (0, 0)),
            pl.BlockSpec((1, hid_p), lambda i: (0, 0)),
            pl.BlockSpec((hid_p, cout_p), lambda i: (0, 0)),
            pl.BlockSpec((1, cout_p), lambda i: (0, 0)),
        ],
        out_specs=pl.BlockSpec((tile_m, cout_p), lambda i: (i, 0)),
        compiler_params=pltpu.CompilerParams(
            dimension_semantics=("parallel",),  # row axis shards across TCs (v7x)
            vmem_limit_bytes=vmem_limit,
        ),
    )(x_p, w1_p, b1_p, w2_p, b2_p)

    return out[:m, :cout].reshape(*orig_shape[:-1], cout)


def init_mlp_params(key, in_features, hidden_features, out_features,
                    dtype=jnp.float32):
    """Deterministic init mimicking nn.Linear's uniform(-1/sqrt(fan_in), ...).
    Weights are stored transposed vs PyTorch: (in, out)."""
    k1, k2, k3, k4 = jax.random.split(key, 4)
    bound1 = 1.0 / (in_features ** 0.5)
    bound2 = 1.0 / (hidden_features ** 0.5)
    w1 = jax.random.uniform(k1, (in_features, hidden_features), dtype,
                            minval=-bound1, maxval=bound1)
    b1 = jax.random.uniform(k2, (hidden_features,), dtype,
                            minval=-bound1, maxval=bound1)
    w2 = jax.random.uniform(k3, (hidden_features, out_features), dtype,
                            minval=-bound2, maxval=bound2)
    b2 = jax.random.uniform(k4, (out_features,), dtype,
                            minval=-bound2, maxval=bound2)
    return w1, b1, w2, b2


def mlp_reference(x, w1, b1, w2, b2):
    h = jnp.dot(x, w1) + b1
    h = jax.nn.gelu(h, approximate=False)
    return jnp.dot(h, w2) + b2


if __name__ == "__main__":
    key = jax.random.PRNGKey(0)
    kx, kp = jax.random.split(key)

    batch, seq, in_features = 2, 8, 32
    hidden_features, out_features = 64, 32

    x = jax.random.normal(kx, (batch, seq, in_features), dtype=jnp.float32)
    w1, b1, w2, b2 = init_mlp_params(kp, in_features, hidden_features,
                                     out_features)

    y_ref = mlp_reference(x, w1, b1, w2, b2)

    # 1) exact-semantics path: f32 MXU + erf GELU -> strict check vs reference.
    y_exact = mlp_pallas(x, w1, b1, w2, b2,
                         compute_dtype=jnp.float32, approximate_gelu=False)
    y_exact = jax.block_until_ready(y_exact)
    assert y_exact.shape == (batch, seq, out_features)
    assert jnp.allclose(y_exact, y_ref, atol=2e-4, rtol=2e-4), \
        "exact path mismatch vs reference"

    # 2) fast default path: bf16 MXU (f32 accumulation) + tanh GELU.
    y_fast = mlp_pallas(x, w1, b1, w2, b2)
    y_fast = jax.block_until_ready(y_fast)
    assert y_fast.shape == (batch, seq, out_features)
    assert jnp.allclose(y_fast, y_ref, atol=5e-2, rtol=5e-2), \
        "fast (bf16 + tanh-GELU) path outside tolerance"

    print("KERNEL_OK")
</pallas_src>

<mosaic_0001>
module attributes {stable_mosaic.version = 11 : i64} {
  func.func @_mlp_kernel(%arg0: i32, %arg1: memref<256x128xf32, #tpu.memory_space<vmem>>, %arg2: memref<128x128xf32, #tpu.memory_space<vmem>>, %arg3: memref<1x128xf32, #tpu.memory_space<vmem>>, %arg4: memref<128x128xf32, #tpu.memory_space<vmem>>, %arg5: memref<1x128xf32, #tpu.memory_space<vmem>>, %arg6: memref<256x128xf32, #tpu.memory_space<vmem>>) attributes {dimension_semantics = [#tpu.dimension_semantics<parallel>], iteration_bounds = array<i64: 1>, scalar_prefetch = 0 : i64, scratch_operands = 0 : i64, tpu.core_type = #tpu.core_type<tc>, window_params = [{transform_indices = @transform_0, window_bounds = array<i64: 256, 128>}, {pipeline_mode = #tpu.pipeline_mode<synchronous>, transform_indices = @transform_1, window_bounds = array<i64: 128, 128>}, {pipeline_mode = #tpu.pipeline_mode<synchronous>, transform_indices = @transform_2, window_bounds = array<i64: 1, 128>}, {pipeline_mode = #tpu.pipeline_mode<synchronous>, transform_indices = @transform_3, window_bounds = array<i64: 128, 128>}, {pipeline_mode = #tpu.pipeline_mode<synchronous>, transform_indices = @transform_4, window_bounds = array<i64: 1, 128>}, {transform_indices = @transform_5, window_bounds = array<i64: 256, 128>}]} {
    %c0 = arith.constant 0 : index
    %c0_0 = arith.constant 0 : index
    %0 = vector.load %arg1[%c0, %c0_0] : memref<256x128xf32, #tpu.memory_space<vmem>>, vector<256x128xf32>
    %c0_1 = arith.constant 0 : index
    %c0_2 = arith.constant 0 : index
    %1 = vector.load %arg2[%c0_1, %c0_2] : memref<128x128xf32, #tpu.memory_space<vmem>>, vector<128x128xf32>
    %cst = arith.constant dense<0.000000e+00> : vector<256x128xf32>
    %2 = tpu.matmul %0, %1, %cst {dimension_numbers = #tpu.dot_dimension_numbers<[1], [0], [0], [1], [0, 0, 1, 1], [], []>} : vector<256x128xf32>, vector<128x128xf32>, vector<256x128xf32> -> vector<256x128xf32>
    %c0_3 = arith.constant 0 : index
    %c0_4 = arith.constant 0 : index
    %3 = vector.load %arg3[%c0_3, %c0_4] : memref<1x128xf32, #tpu.memory_space<vmem>>, vector<1x128xf32>
    %4 = vector.broadcast %3 : vector<1x128xf32> to vector<256x128xf32>
    %5 = arith.addf %2, %4 : vector<256x128xf32>
    %cst_5 = arith.constant 5.000000e-01 : f32
    %6 = vector.broadcast %cst_5 : f32 to vector<256x128xf32>
    %7 = arith.mulf %6, %5 : vector<256x128xf32>
    %cst_6 = arith.constant 0.707106769 : f32
    %8 = vector.broadcast %cst_6 : f32 to vector<256x128xf32>
    %9 = arith.mulf %5, %8 : vector<256x128xf32>
    %10 = math.erf %9 : vector<256x128xf32>
    %cst_7 = arith.constant 1.000000e+00 : f32
    %11 = vector.broadcast %cst_7 : f32 to vector<256x128xf32>
    %12 = arith.addf %11, %10 : vector<256x128xf32>
    %13 = arith.mulf %7, %12 : vector<256x128xf32>
    %c0_8 = arith.constant 0 : index
    %c0_9 = arith.constant 0 : index
    %14 = vector.load %arg4[%c0_8, %c0_9] : memref<128x128xf32, #tpu.memory_space<vmem>>, vector<128x128xf32>
    %cst_10 = arith.constant dense<0.000000e+00> : vector<256x128xf32>
    %15 = tpu.matmul %13, %14, %cst_10 {dimension_numbers = #tpu.dot_dimension_numbers<[1], [0], [0], [1], [0, 0, 1, 1], [], []>} : vector<256x128xf32>, vector<128x128xf32>, vector<256x128xf32> -> vector<256x128xf32>
    %c0_11 = arith.constant 0 : index
    %c0_12 = arith.constant 0 : index
    %16 = vector.load %arg5[%c0_11, %c0_12] : memref<1x128xf32, #tpu.memory_space<vmem>>, vector<1x128xf32>
    %17 = vector.broadcast %16 : vector<1x128xf32> to vector<256x128xf32>
    %18 = arith.addf %15, %17 : vector<256x128xf32>
    %c0_13 = arith.constant 0 : index
    %c0_14 = arith.constant 0 : index
    %19 = vector.load %arg6[%c0_13, %c0_14] : memref<256x128xf32, #tpu.memory_space<vmem>>, vector<256x128xf32>
    tpu.vector_store %arg6[%c0_13, %c0_14], %18 {strides = array<i32>} : memref<256x128xf32, #tpu.memory_space<vmem>>, vector<256x128xf32>,
    return
  }
  func.func @transform_0(%arg0: i32) -> (i32, i32) {
    %c0_i32 = arith.constant 0 : i32
    %c0_i32_0 = arith.constant 0 : i32
    return %arg0, %c0_i32 : i32, i32
  }
  func.func @transform_1(%arg0: i32) -> (i32, i32) {
    %c0_i32 = arith.constant 0 : i32
    %c0_i32_0 = arith.constant 0 : i32
    %c0_i32_1 = arith.constant 0 : i32
    return %c0_i32, %c0_i32_0 : i32, i32
  }
  func.func @transform_2(%arg0: i32) -> (i32, i32) {
    %c0_i32 = arith.constant 0 : i32
    %c0_i32_0 = arith.constant 0 : i32
    %c0_i32_1 = arith.constant 0 : i32
    return %c0_i32, %c0_i32_0 : i32, i32
  }
  func.func @transform_3(%arg0: i32) -> (i32, i32) {
    %c0_i32 = arith.constant 0 : i32
    %c0_i32_0 = arith.constant 0 : i32
    %c0_i32_1 = arith.constant 0 : i32
    return %c0_i32, %c0_i32_0 : i32, i32
  }
  func.func @transform_4(%arg0: i32) -> (i32, i32) {
    %c0_i32 = arith.constant 0 : i32
    %c0_i32_0 = arith.constant 0 : i32
    %c0_i32_1 = arith.constant 0 : i32
    return %c0_i32, %c0_i32_0 : i32, i32
  }
  func.func @transform_5(%arg0: i32) -> (i32, i32) {
    %c0_i32 = arith.constant 0 : i32
    %c0_i32_0 = arith.constant 0 : i32
    return %arg0, %c0_i32 : i32, i32
  }
}

</mosaic_0001>

<llo_original>
// kernel: tpu_custom_call.1
$region0: #{tpu_custom_call.1}
  #allocation0 [shape = 'u32[]', space=smem, size = 0x4, offset = 0x4, fixed_abs, tag = 'smem constant byte address 0x4 - core index']
  #allocation1 [shape = 'u32[144,128]{1,0:T(1,128)}', space=vmem, size = 0x12000, scoped, tag = 'internal scratch']
  %s0 = inlined_call_operand.hbm [shape: f32[256,128], index: 0, kind: input, shape index: {}]
  %s1 = inlined_call_operand.hbm [shape: f32[128,128], index: 1, kind: input, shape index: {}]
  %s2 = inlined_call_operand.vmem [shape: f32[1,128], index: 2, kind: input, shape index: {}]
  %s3 = inlined_call_operand.hbm [shape: f32[128,128], index: 3, kind: input, shape index: {}]
  %s4 = inlined_call_operand.vmem [shape: f32[1,128], index: 4, kind: input, shape index: {}]
  %s5 = inlined_call_operand.hbm [shape: f32[256,128], index: 5, kind: output, shape index: {}]
  %s6 = sld [smem:[#allocation0]]
  $region42: #{tpu_custom_call.1} parent=0
    _
  %s8 = ssub.s32 1, %s6
  %s9 = scalar_select 0, %s8, %s6
  $region1: #{tpu_custom_call.1} parent=0
    #allocation2 [shape = 'u8[131072]{0}', space=vmem, size = 0x20000, scoped, tag = 'input window, operand 0, single buffered']
    #allocation3 [shape = 's32[1]{0}', space=sflag, size = 0x4, scoped, tag = 'scoped memory for tpu_custom_call.1']
    #allocation4 [shape = 's32[1]{0}', space=sflag, size = 0x4, scoped, tag = 'scoped memory for tpu_custom_call.1']
    #allocation5 [shape = 'u8[65536]{0}', space=vmem, size = 0x10000, scoped, tag = 'input window, operand 1, single buffered']
    #allocation6 [shape = 's32[1]{0}', space=sflag, size = 0x4, scoped, tag = 'scoped memory for tpu_custom_call.1']
    #allocation7 [shape = 'u8[65536]{0}', space=vmem, size = 0x10000, scoped, tag = 'input window, operand 3, single buffered']
    #allocation8 [shape = 'u8[131072]{0}', space=vmem, size = 0x20000, scoped, tag = 'output window, operand 0, single buffered']
    %10 = vsyncpa [#allocation3], 0
    %11 = vsyncpa [#allocation6], 0
    %12 = vsyncpa [#allocation4], 0
    // Predicated region
    $region2: #{tpu_custom_call.1} parent=1 // pred_check
      _
    $region3: #{tpu_custom_call.1} parent=1 // pred_check_branch
      %14 = sbr.rel (0) target = $region5
    $region4: #{tpu_custom_call.1} parent=1 // pred_region
      %s16 = ssub.s32 4096, 4096
      %17 = vsyncadd [#allocation3], %s16
      %s18 = sshll.u32 [#allocation2], 4
      %s19 = int_to_ptr.vmem [resolvable:$true] %s18
      %24 = dma.hbm_to_vmem [thread:$0]  %s0, 4096, %s19, [#allocation3], 128, 128, 8
    $region5: #{tpu_custom_call.1} parent=1 // pred_fallthru
      _
    // Predicated region
    $region6: #{tpu_custom_call.1} parent=1 // pred_check
      _
    $region7: #{tpu_custom_call.1} parent=1 // pred_check_branch
      %26 = sbr.rel (0) target = $region9
    $region8: #{tpu_custom_call.1} parent=1 // pred_region
      %s28 = ssub.s32 2048, 2048
      %29 = vsyncadd [#allocation6], %s28
      %s30 = sshll.u32 [#allocation5], 4
      %s31 = int_to_ptr.vmem [resolvable:$true] %s30
      %36 = dma.hbm_to_vmem [thread:$0]  %s1, 2048, %s31, [#allocation6], 128, 128, 8
    $region9: #{tpu_custom_call.1} parent=1 // pred_fallthru
      _
    // Predicated region
    $region10: #{tpu_custom_call.1} parent=1 // pred_check
      _
    $region11: #{tpu_custom_call.1} parent=1 // pred_check_branch
      %38 = sbr.rel (0) target = $region13
    $region12: #{tpu_custom_call.1} parent=1 // pred_region
      _
    $region13: #{tpu_custom_call.1} parent=1 // pred_fallthru
      _
    // Predicated region
    $region14: #{tpu_custom_call.1} parent=1 // pred_check
      _
    $region15: #{tpu_custom_call.1} parent=1 // pred_check_branch
      %40 = sbr.rel (0) target = $region17
    $region16: #{tpu_custom_call.1} parent=1 // pred_region
      %s42 = ssub.s32 2048, 2048
      %43 = vsyncadd [#allocation6], %s42
      %s44 = sshll.u32 [#allocation7], 4
      %s45 = int_to_ptr.vmem [resolvable:$true] %s44
      %50 = dma.hbm_to_vmem [thread:$0]  %s3, 2048, %s45, [#allocation6], 128, 128, 8
    $region17: #{tpu_custom_call.1} parent=1 // pred_fallthru
      _
    // Predicated region
    $region18: #{tpu_custom_call.1} parent=1 // pred_check
      _
    $region19: #{tpu_custom_call.1} parent=1 // pred_check_branch
      %52 = sbr.rel (0) target = $region21
    $region20: #{tpu_custom_call.1} parent=1 // pred_region
      _
    $region21: #{tpu_custom_call.1} parent=1 // pred_fallthru
      _
    // Predicated region
    $region22: #{tpu_custom_call.1} parent=1 // pred_check
      _
    $region23: #{tpu_custom_call.1} parent=1 // pred_check_branch
      %54 = sbr.rel (0) target = $region25
    $region24: #{tpu_custom_call.1} parent=1 // pred_region
      %55 = dma.done [#allocation3], 4096
    $region25: #{tpu_custom_call.1} parent=1 // pred_fallthru
      _
    // Predicated region
    $region26: #{tpu_custom_call.1} parent=1 // pred_check
      _
    $region27: #{tpu_custom_call.1} parent=1 // pred_check_branch
      %57 = sbr.rel (0) target = $region29
    $region28: #{tpu_custom_call.1} parent=1 // pred_region
      %58 = dma.done [#allocation6], 2048
    $region29: #{tpu_custom_call.1} parent=1 // pred_fallthru
      _
    // Predicated region
    $region30: #{tpu_custom_call.1} parent=1 // pred_check
      _
    $region31: #{tpu_custom_call.1} parent=1 // pred_check_branch
      %60 = sbr.rel (0) target = $region33
    $region32: #{tpu_custom_call.1} parent=1 // pred_region
      %61 = dma.done [#allocation6], 2048
    $region33: #{tpu_custom_call.1} parent=1 // pred_fallthru
      _
    %v62 = vld [vmem:[#allocation2] sm:$0xff]
    %v63 = vld [vmem:[#allocation2 + $0x8] sm:$0xff]
    %v64 = vld [vmem:[#allocation2 + $0x10] sm:$0xff]
    %v65 = vld [vmem:[#allocation2 + $0x18] sm:$0xff]
    %v66 = vld [vmem:[#allocation2 + $0x20] sm:$0xff]
    %v67 = vld [vmem:[#allocation2 + $0x28] sm:$0xff]
    %v68 = vld [vmem:[#allocation2 + $0x30] sm:$0xff]
    %v69 = vld [vmem:[#allocation2 + $0x38] sm:$0xff]
    %v70 = vld [vmem:[#allocation2 + $0x40] sm:$0xff]
    %v71 = vld [vmem:[#allocation2 + $0x48] sm:$0xff]
    %v72 = vld [vmem:[#allocation2 + $0x50] sm:$0xff]
    %v73 = vld [vmem:[#allocation2 + $0x58] sm:$0xff]
    %v74 = vld [vmem:[#allocation2 + $0x60] sm:$0xff]
    %v75 = vld [vmem:[#allocation2 + $0x68] sm:$0xff]
    %v76 = vld [vmem:[#allocation2 + $0x70] sm:$0xff]
    %v77 = vld [vmem:[#allocation2 + $0x78] sm:$0xff]
    %v78 = vld [vmem:[#allocation2 + $0x80] sm:$0xff]
    %v79 = vld [vmem:[#allocation2 + $0x88] sm:$0xff]
    %v80 = vld [vmem:[#allocation2 + $0x90] sm:$0xff]
    %v81 = vld [vmem:[#allocation2 + $0x98] sm:$0xff]
    %v82 = vld [vmem:[#allocation2 + $0xa0] sm:$0xff]
    %v83 = vld [vmem:[#allocation2 + $0xa8] sm:$0xff]
    %v84 = vld [vmem:[#allocation2 + $0xb0] sm:$0xff]
    %v85 = vld [vmem:[#allocation2 + $0xb8] sm:$0xff]
    %v86 = vld [vmem:[#allocation2 + $0xc0] sm:$0xff]
    %v87 = vld [vmem:[#allocation2 + $0xc8] sm:$0xff]
    %v88 = vld [vmem:[#allocation2 + $0xd0] sm:$0xff]
    %v89 = vld [vmem:[#allocation2 + $0xd8] sm:$0xff]
    %v90 = vld [vmem:[#allocation2 + $0xe0] sm:$0xff]
    %v91 = vld [vmem:[#allocation2 + $0xe8] sm:$0xff]
    %v92 = vld [vmem:[#allocation2 + $0xf0] sm:$0xff]
    %v93 = vld [vmem:[#allocation2 + $0xf8] sm:$0xff]
    %v94 = vld [vmem:[#allocation5] sm:$0xff]
    %v95 = vld [vmem:[#allocation5 + $0x8] sm:$0xff]
    %v96 = vld [vmem:[#allocation5 + $0x10] sm:$0xff]
    %v97 = vld [vmem:[#allocation5 + $0x18] sm:$0xff]
    %v98 = vld [vmem:[#allocation5 + $0x20] sm:$0xff]
    %v99 = vld [vmem:[#allocation5 + $0x28] sm:$0xff]
    %v100 = vld [vmem:[#allocation5 + $0x30] sm:$0xff]
    %v101 = vld [vmem:[#allocation5 + $0x38] sm:$0xff]
    %v102 = vld [vmem:[#allocation5 + $0x40] sm:$0xff]
    %v103 = vld [vmem:[#allocation5 + $0x48] sm:$0xff]
    %v104 = vld [vmem:[#allocation5 + $0x50] sm:$0xff]
    %v105 = vld [vmem:[#allocation5 + $0x58] sm:$0xff]
    %v106 = vld [vmem:[#allocation5 + $0x60] sm:$0xff]
    %v107 = vld [vmem:[#allocation5 + $0x68] sm:$0xff]
    %v108 = vld [vmem:[#allocation5 + $0x70] sm:$0xff]
    %v109 = vld [vmem:[#allocation5 + $0x78] sm:$0xff]
    %v110 = vld [vmem:[%s2] sm:$0x1]
    %v112 = vlaneseq
    %v113 = vshrl.u32 %v112, 7
    %v114 = vsub.s32 0, %v113
    %v115 = vrot.slane %v110, %v114
    %117 = vmatprep.subr.mxu0 0.0
    %118 = vmatpush1.msra.mxu0 %v94
    %119 = vmatprep.subr.mxu0 0.0
    %120 = vmatpush1.msra.mxu0 %v95
    %121 = vmatprep.subr.mxu0 0.0
    %122 = vmatpush1.msra.mxu0 %v96
    %123 = vmatprep.subr.mxu0 0.0
    %124 = vmatpush1.msra.mxu0 %v97
    %125 = vmatprep.subr.mxu0 0.0
    %126 = vmatpush1.msra.mxu0 %v98
    %127 = vmatprep.subr.mxu0 0.0
    %128 = vmatpush1.msra.mxu0 %v99
    %129 = vmatprep.subr.mxu0 0.0
    %130 = vmatpush1.msra.mxu0 %v100
    %131 = vmatprep.subr.mxu0 0.0
    %132 = vmatpush1.msra.mxu0 %v101
    %133 = vmatprep.subr.mxu0 0.0
    %134 = vmatpush1.msra.mxu0 %v102
    %135 = vmatprep.subr.mxu0 0.0
    %136 = vmatpush1.msra.mxu0 %v103
    %137 = vmatprep.subr.mxu0 0.0
    %138 = vmatpush1.msra.mxu0 %v104
    %139 = vmatprep.subr.mxu0 0.0
    %140 = vmatpush1.msra.mxu0 %v105
    %141 = vmatprep.subr.mxu0 0.0
    %142 = vmatpush1.msra.mxu0 %v106
    %143 = vmatprep.subr.mxu0 0.0
    %144 = vmatpush1.msra.mxu0 %v107
    %145 = vmatprep.subr.mxu0 0.0
    %146 = vmatpush1.msra.mxu0 %v108
    %147 = vmatprep.subr.mxu0 0.0
    %148 = vmatpush1.msra.mxu0 %v109
    %149 = vmatprep.subr.mxu0 0.0
    %150 = vmatpush1.msra.mxu0 0.0
    %151 = vmatprep.subr.mxu0 0.0
    %152 = vmatpush1.msra.mxu0 0.0
    %153 = vmatprep.subr.mxu0 0.0
    %154 = vmatpush1.msra.mxu0 0.0
    %155 = vmatprep.subr.mxu0 0.0
    %156 = vmatpush1.msra.mxu0 0.0
    %157 = vmatprep.subr.mxu0 0.0
    %158 = vmatpush1.msra.mxu0 0.0
    %159 = vmatprep.subr.mxu0 0.0
    %160 = vmatpush1.msra.mxu0 0.0
    %161 = vmatprep.subr.mxu0 0.0
    %162 = vmatpush1.msra.mxu0 0.0
    %163 = vmatprep.subr.mxu0 0.0
    %164 = vmatpush1.msra.mxu0 0.0
    %165 = vmatprep.subr.mxu0 0.0
    %166 = vmatpush1.msra.mxu0 0.0
    %167 = vmatprep.subr.mxu0 0.0
    %168 = vmatpush1.msra.mxu0 0.0
    %169 = vmatprep.subr.mxu0 0.0
    %170 = vmatpush1.msra.mxu0 0.0
    %171 = vmatprep.subr.mxu0 0.0
    %172 = vmatpush1.msra.mxu0 0.0
    %173 = vmatprep.subr.mxu0 0.0
    %174 = vmatpush1.msra.mxu0 0.0
    %175 = vmatprep.subr.mxu0 0.0
    %176 = vmatpush1.msra.mxu0 0.0
    %177 = vmatprep.subr.mxu0 0.0
    %178 = vmatpush1.msra.mxu0 0.0
    %179 = vmatprep.subr.mxu0 0.0
    %180 = vmatpush1.msra.mxu0 0.0
    %181 = vmatprep.mubr.f32.mxu0 0.0
    %182 = vmatmul.mubr.f32.gmra.mrb[0].mxu0 %v62
    %v183 = vpop.f32.mrb[0].mxu0
    %v184 = vadd.f32 %v115, %v183
    %v185 = vpop.f32.mrb[0].mxu0
    %186 = vmatprep.mubr.f32.mxu0 0.0
    %187 = vmatmul.mubr.f32.gmra.mrb[0].mxu0 %v63
    %v188 = vpop.f32.mrb[0].mxu0
    %v189 = vadd.f32 %v115, %v188
    %v190 = vpop.f32.mrb[0].mxu0
    %191 = vmatprep.mubr.f32.mxu0 0.0
    %192 = vmatmul.mubr.f32.gmra.mrb[0].mxu0 %v64
    %v193 = vpop.f32.mrb[0].mxu0
    %v194 = vadd.f32 %v115, %v193
    %v195 = vpop.f32.mrb[0].mxu0
    %196 = vmatprep.mubr.f32.mxu0 0.0
    %197 = vmatmul.mubr.f32.gmra.mrb[0].mxu0 %v65
    %v198 = vpop.f32.mrb[0].mxu0
    %v199 = vadd.f32 %v115, %v198
    %v200 = vpop.f32.mrb[0].mxu0
    %201 = vmatprep.mubr.f32.mxu0 0.0
    %202 = vmatmul.mubr.f32.gmra.mrb[0].mxu0 %v66
    %v203 = vpop.f32.mrb[0].mxu0
    %v204 = vadd.f32 %v115, %v203
    %v205 = vpop.f32.mrb[0].mxu0
    %206 = vmatprep.mubr.f32.mxu0 0.0
    %207 = vmatmul.mubr.f32.gmra.mrb[0].mxu0 %v67
    %v208 = vpop.f32.mrb[0].mxu0
    %v209 = vadd.f32 %v115, %v208
    %v210 = vpop.f32.mrb[0].mxu0
    %211 = vmatprep.mubr.f32.mxu0 0.0
    %212 = vmatmul.mubr.f32.gmra.mrb[0].mxu0 %v68
    %v213 = vpop.f32.mrb[0].mxu0
    %v214 = vadd.f32 %v115, %v213
    %v215 = vpop.f32.mrb[0].mxu0
    %216 = vmatprep.mubr.f32.mxu0 0.0
    %217 = vmatmul.mubr.f32.gmra.mrb[0].mxu0 %v69
    %v218 = vpop.f32.mrb[0].mxu0
    %v219 = vadd.f32 %v115, %v218
    %v220 = vpop.f32.mrb[0].mxu0
    %221 = vmatprep.mubr.f32.mxu0 0.0
    %222 = vmatmul.mubr.f32.gmra.mrb[0].mxu0 %v70
    %v223 = vpop.f32.mrb[0].mxu0
    %v224 = vadd.f32 %v115, %v223
    %v225 = vpop.f32.mrb[0].mxu0
    %226 = vmatprep.mubr.f32.mxu0 0.0
    %227 = vmatmul.mubr.f32.gmra.mrb[0].mxu0 %v71
    %v228 = vpop.f32.mrb[0].mxu0
    %v229 = vadd.f32 %v115, %v228
    %v230 = vpop.f32.mrb[0].mxu0
    %231 = vmatprep.mubr.f32.mxu0 0.0
    %232 = vmatmul.mubr.f32.gmra.mrb[0].mxu0 %v72
    %v233 = vpop.f32.mrb[0].mxu0
    %v234 = vadd.f32 %v115, %v233
    %v235 = vpop.f32.mrb[0].mxu0
    %236 = vmatprep.mubr.f32.mxu0 0.0
    %237 = vmatmul.mubr.f32.gmra.mrb[0].mxu0 %v73
    %v238 = vpop.f32.mrb[0].mxu0
    %v239 = vadd.f32 %v115, %v238
    %v240 = vpop.f32.mrb[0].mxu0
    %241 = vmatprep.mubr.f32.mxu0 0.0
    %242 = vmatmul.mubr.f32.gmra.mrb[0].mxu0 %v74
    %v243 = vpop.f32.mrb[0].mxu0
    %v244 = vadd.f32 %v115, %v243
    %v245 = vpop.f32.mrb[0].mxu0
    %246 = vmatprep.mubr.f32.mxu0 0.0
    %247 = vmatmul.mubr.f32.gmra.mrb[0].mxu0 %v75
    %v248 = vpop.f32.mrb[0].mxu0
    %v249 = vadd.f32 %v115, %v248
    %v250 = vpop.f32.mrb[0].mxu0
    %251 = vmatprep.mubr.f32.mxu0 0.0
    %252 = vmatmul.mubr.f32.gmra.mrb[0].mxu0 %v76
    %v253 = vpop.f32.mrb[0].mxu0
    %v254 = vadd.f32 %v115, %v253
    %v255 = vpop.f32.mrb[0].mxu0
    %256 = vmatprep.mubr.f32.mxu0 0.0
    %257 = vmatmul.mubr.f32.gmra.mrb[0].mxu0 %v77
    %v258 = vpop.f32.mrb[0].mxu0
    %v259 = vadd.f32 %v115, %v258
    %v260 = vpop.f32.mrb[0].mxu0
    %261 = vmatprep.mubr.f32.mxu0 0.0
    %262 = vmatmul.mubr.f32.gmra.mrb[0].mxu0 %v78
    %v263 = vpop.f32.mrb[0].mxu0
    %v264 = vadd.f32 %v115, %v263
    %v265 = vpop.f32.mrb[0].mxu0
    %266 = vmatprep.mubr.f32.mxu0 0.0
    %267 = vmatmul.mubr.f32.gmra.mrb[0].mxu0 %v79
    %v268 = vpop.f32.mrb[0].mxu0
    %v269 = vadd.f32 %v115, %v268
    %v270 = vpop.f32.mrb[0].mxu0
    %271 = vmatprep.mubr.f32.mxu0 0.0
    %272 = vmatmul.mubr.f32.gmra.mrb[0].mxu0 %v80
    %v273 = vpop.f32.mrb[0].mxu0
    %v274 = vadd.f32 %v115, %v273
    %v275 = vpop.f32.mrb[0].mxu0
    %276 = vmatprep.mubr.f32.mxu0 0.0
    %277 = vmatmul.mubr.f32.gmra.mrb[0].mxu0 %v81
    %v278 = vpop.f32.mrb[0].mxu0
    %v279 = vadd.f32 %v115, %v278
    %v280 = vpop.f32.mrb[0].mxu0
    %281 = vmatprep.mubr.f32.mxu0 0.0
    %282 = vmatmul.mubr.f32.gmra.mrb[0].mxu0 %v82
    %v283 = vpop.f32.mrb[0].mxu0
    %v284 = vadd.f32 %v115, %v283
    %v285 = vpop.f32.mrb[0].mxu0
    %286 = vmatprep.mubr.f32.mxu0 0.0
    %287 = vmatmul.mubr.f32.gmra.mrb[0].mxu0 %v83
    %v288 = vpop.f32.mrb[0].mxu0
    %v289 = vadd.f32 %v115, %v288
    %v290 = vpop.f32.mrb[0].mxu0
    %291 = vmatprep.mubr.f32.mxu0 0.0
    %292 = vmatmul.mubr.f32.gmra.mrb[0].mxu0 %v84
    %v293 = vpop.f32.mrb[0].mxu0
    %v294 = vadd.f32 %v115, %v293
    %v295 = vpop.f32.mrb[0].mxu0
    %296 = vmatprep.mubr.f32.mxu0 0.0
    %297 = vmatmul.mubr.f32.gmra.mrb[0].mxu0 %v85
    %v298 = vpop.f32.mrb[0].mxu0
    %v299 = vadd.f32 %v115, %v298
    %v300 = vpop.f32.mrb[0].mxu0
    %301 = vmatprep.mubr.f32.mxu0 0.0
    %302 = vmatmul.mubr.f32.gmra.mrb[0].mxu0 %v86
    %v303 = vpop.f32.mrb[0].mxu0
    %v304 = vadd.f32 %v115, %v303
    %v305 = vpop.f32.mrb[0].mxu0
    %306 = vmatprep.mubr.f32.mxu0 0.0
    %307 = vmatmul.mubr.f32.gmra.mrb[0].mxu0 %v87
    %v308 = vpop.f32.mrb[0].mxu0
    %v309 = vadd.f32 %v115, %v308
    %v310 = vpop.f32.mrb[0].mxu0
    %311 = vmatprep.mubr.f32.mxu0 0.0
    %312 = vmatmul.mubr.f32.gmra.mrb[0].mxu0 %v88
    %v313 = vpop.f32.mrb[0].mxu0
    %v314 = vadd.f32 %v115, %v313
    %v315 = vpop.f32.mrb[0].mxu0
    %316 = vmatprep.mubr.f32.mxu0 0.0
    %317 = vmatmul.mubr.f32.gmra.mrb[0].mxu0 %v89
    %v318 = vpop.f32.mrb[0].mxu0
    %v319 = vadd.f32 %v115, %v318
    %v320 = vpop.f32.mrb[0].mxu0
    %321 = vmatprep.mubr.f32.mxu0 0.0
    %322 = vmatmul.mubr.f32.gmra.mrb[0].mxu0 %v90
    %v323 = vpop.f32.mrb[0].mxu0
    %v324 = vadd.f32 %v115, %v323
    %v325 = vpop.f32.mrb[0].mxu0
    %326 = vmatprep.mubr.f32.mxu0 0.0
    %327 = vmatmul.mubr.f32.gmra.mrb[0].mxu0 %v91
    %v328 = vpop.f32.mrb[0].mxu0
    %v329 = vadd.f32 %v115, %v328
    %v330 = vpop.f32.mrb[0].mxu0
    %331 = vmatprep.mubr.f32.mxu0 0.0
    %332 = vmatmul.mubr.f32.gmra.mrb[0].mxu0 %v92
    %v333 = vpop.f32.mrb[0].mxu0
    %v334 = vadd.f32 %v115, %v333
    %v335 = vpop.f32.mrb[0].mxu0
    %336 = vmatprep.mubr.f32.mxu0 0.0
    %337 = vmatmul.mubr.f32.gmra.mrb[0].mxu0 %v93
    %v338 = vpop.f32.mrb[0].mxu0
    %v339 = vadd.f32 %v115, %v338
    %v340 = vpop.f32.mrb[0].mxu0
    %341 = vdwg.mxu0
    %v342 = vmul.f32 %v184, 0.5
    %v343 = vmul.f32 %v189, 0.5
    %v344 = vmul.f32 %v194, 0.5
    %v345 = vmul.f32 %v199, 0.5
    %v346 = vmul.f32 %v204, 0.5
    %v347 = vmul.f32 %v209, 0.5
    %v348 = vmul.f32 %v214, 0.5
    %v349 = vmul.f32 %v219, 0.5
    %v350 = vmul.f32 %v224, 0.5
    %v351 = vmul.f32 %v229, 0.5
    %v352 = vmul.f32 %v234, 0.5
    %v353 = vmul.f32 %v239, 0.5
    %v354 = vmul.f32 %v244, 0.5
    %v355 = vmul.f32 %v249, 0.5
    %v356 = vmul.f32 %v254, 0.5
    %v357 = vmul.f32 %v259, 0.5
    %v358 = vmul.f32 %v264, 0.5
    %v359 = vmul.f32 %v269, 0.5
    %v360 = vmul.f32 %v274, 0.5
    %v361 = vmul.f32 %v279, 0.5
    %v362 = vmul.f32 %v284, 0.5
    %v363 = vmul.f32 %v289, 0.5
    %v364 = vmul.f32 %v294, 0.5
    %v365 = vmul.f32 %v299, 0.5
    %v366 = vmul.f32 %v304, 0.5
    %v367 = vmul.f32 %v309, 0.5
    %v368 = vmul.f32 %v314, 0.5
    %v369 = vmul.f32 %v319, 0.5
    %v370 = vmul.f32 %v324, 0.5
    %v371 = vmul.f32 %v329, 0.5
    %v372 = vmul.f32 %v334, 0.5
    %v373 = vmul.f32 %v339, 0.5
    %v374 = vmul.f32 %v184, 0.70710677
    %v375 = vmul.f32 %v189, 0.70710677
    %v376 = vmul.f32 %v194, 0.70710677
    %v377 = vmul.f32 %v199, 0.70710677
    %v378 = vmul.f32 %v204, 0.70710677
    %v379 = vmul.f32 %v209, 0.70710677
    %v380 = vmul.f32 %v214, 0.70710677
    %v381 = vmul.f32 %v219, 0.70710677
    %v382 = vmul.f32 %v224, 0.70710677
    %v383 = vmul.f32 %v229, 0.70710677
    %v384 = vmul.f32 %v234, 0.70710677
    %v385 = vmul.f32 %v239, 0.70710677
    %v386 = vmul.f32 %v244, 0.70710677
    %v387 = vmul.f32 %v249, 0.70710677
    %v388 = vmul.f32 %v254, 0.70710677
    %v389 = vmul.f32 %v259, 0.70710677
    %v390 = vmul.f32 %v264, 0.70710677
    %v391 = vmul.f32 %v269, 0.70710677
    %v392 = vmul.f32 %v274, 0.70710677
    %v393 = vmul.f32 %v279, 0.70710677
    %v394 = vmul.f32 %v284, 0.70710677
    %v395 = vmul.f32 %v289, 0.70710677
    %v396 = vmul.f32 %v294, 0.70710677
    %v397 = vmul.f32 %v299, 0.70710677
    %v398 = vmul.f32 %v304, 0.70710677
    %v399 = vmul.f32 %v309, 0.70710677
    %v400 = vmul.f32 %v314, 0.70710677
    %v401 = vmul.f32 %v319, 0.70710677
    %v402 = vmul.f32 %v324, 0.70710677
    %v403 = vmul.f32 %v329, 0.70710677
    %v404 = vmul.f32 %v334, 0.70710677
    %v405 = vmul.f32 %v339, 0.70710677
    %v406 = verf.f32.pop %v374
    %v407 = verf.f32.pop %v375
    %v408 = verf.f32.pop %v376
    %v409 = verf.f32.pop %v377
    %v410 = verf.f32.pop %v378
    %v411 = verf.f32.pop %v379
    %v412 = verf.f32.pop %v380
    %v413 = verf.f32.pop %v381
    %v414 = verf.f32.pop %v382
    %v415 = verf.f32.pop %v383
    %v416 = verf.f32.pop %v384
    %v417 = verf.f32.pop %v385
    %v418 = verf.f32.pop %v386
    %v419 = verf.f32.pop %v387
    %v420 = verf.f32.pop %v388
    %v421 = verf.f32.pop %v389
    %v422 = verf.f32.pop %v390
    %v423 = verf.f32.pop %v391
    %v424 = verf.f32.pop %v392
    %v425 = verf.f32.pop %v393
    %v426 = verf.f32.pop %v394
    %v427 = verf.f32.pop %v395
    %v428 = verf.f32.pop %v396
    %v429 = verf.f32.pop %v397
    %v430 = verf.f32.pop %v398
    %v431 = verf.f32.pop %v399
    %v432 = verf.f32.pop %v400
    %v433 = verf.f32.pop %v401
    %v434 = verf.f32.pop %v402
    %v435 = verf.f32.pop %v403
    %v436 = verf.f32.pop %v404
    %v437 = verf.f32.pop %v405
    %v438 = vadd.f32 %v406, 1.0
    %v439 = vadd.f32 %v407, 1.0
    %v440 = vadd.f32 %v408, 1.0
    %v441 = vadd.f32 %v409, 1.0
    %v442 = vadd.f32 %v410, 1.0
    %v443 = vadd.f32 %v411, 1.0
    %v444 = vadd.f32 %v412, 1.0
    %v445 = vadd.f32 %v413, 1.0
    %v446 = vadd.f32 %v414, 1.0
    %v447 = vadd.f32 %v415, 1.0
    %v448 = vadd.f32 %v416, 1.0
    %v449 = vadd.f32 %v417, 1.0
    %v450 = vadd.f32 %v418, 1.0
    %v451 = vadd.f32 %v419, 1.0
    %v452 = vadd.f32 %v420, 1.0
    %v453 = vadd.f32 %v421, 1.0
    %v454 = vadd.f32 %v422, 1.0
    %v455 = vadd.f32 %v423, 1.0
    %v456 = vadd.f32 %v424, 1.0
    %v457 = vadd.f32 %v425, 1.0
    %v458 = vadd.f32 %v426, 1.0
    %v459 = vadd.f32 %v427, 1.0
    %v460 = vadd.f32 %v428, 1.0
    %v461 = vadd.f32 %v429, 1.0
    %v462 = vadd.f32 %v430, 1.0
    %v463 = vadd.f32 %v431, 1.0
    %v464 = vadd.f32 %v432, 1.0
    %v465 = vadd.f32 %v433, 1.0
    %v466 = vadd.f32 %v434, 1.0
    %v467 = vadd.f32 %v435, 1.0
    %v468 = vadd.f32 %v436, 1.0
    %v469 = vadd.f32 %v437, 1.0
    %v470 = vmul.f32 %v342, %v438
    %v471 = vmul.f32 %v343, %v439
    %v472 = vmul.f32 %v344, %v440
    %v473 = vmul.f32 %v345, %v441
    %v474 = vmul.f32 %v346, %v442
    %v475 = vmul.f32 %v347, %v443
    %v476 = vmul.f32 %v348, %v444
    %v477 = vmul.f32 %v349, %v445
    %v478 = vmul.f32 %v350, %v446
    %v479 = vmul.f32 %v351, %v447
    %v480 = vmul.f32 %v352, %v448
    %v481 = vmul.f32 %v353, %v449
    %v482 = vmul.f32 %v354, %v450
    %v483 = vmul.f32 %v355, %v451
    %v484 = vmul.f32 %v356, %v452
    %v485 = vmul.f32 %v357, %v453
    %v486 = vmul.f32 %v358, %v454
    %v487 = vmul.f32 %v359, %v455
    %v488 = vmul.f32 %v360, %v456
    %v489 = vmul.f32 %v361, %v457
    %v490 = vmul.f32 %v362, %v458
    %v491 = vmul.f32 %v363, %v459
    %v492 = vmul.f32 %v364, %v460
    %v493 = vmul.f32 %v365, %v461
    %v494 = vmul.f32 %v366, %v462
    %v495 = vmul.f32 %v367, %v463
    %v496 = vmul.f32 %v368, %v464
    %v497 = vmul.f32 %v369, %v465
    %v498 = vmul.f32 %v370, %v466
    %v499 = vmul.f32 %v371, %v467
    %v500 = vmul.f32 %v372, %v468
    %v501 = vmul.f32 %v373, %v469
    %v502 = vld [vmem:[#allocation7] sm:$0xff]
    %v503 = vld [vmem:[#allocation7 + $0x8] sm:$0xff]
    %v504 = vld [vmem:[#allocation7 + $0x10] sm:$0xff]
    %v505 = vld [vmem:[#allocation7 + $0x18] sm:$0xff]
    %v506 = vld [vmem:[#allocation7 + $0x20] sm:$0xff]
    %v507 = vld [vmem:[#allocation7 + $0x28] sm:$0xff]
    %v508 = vld [vmem:[#allocation7 + $0x30] sm:$0xff]
    %v509 = vld [vmem:[#allocation7 + $0x38] sm:$0xff]
    %v510 = vld [vmem:[#allocation7 + $0x40] sm:$0xff]
    %v511 = vld [vmem:[#allocation7 + $0x48] sm:$0xff]
    %v512 = vld [vmem:[#allocation7 + $0x50] sm:$0xff]
    %v513 = vld [vmem:[#allocation7 + $0x58] sm:$0xff]
    %v514 = vld [vmem:[#allocation7 + $0x60] sm:$0xff]
    %v515 = vld [vmem:[#allocation7 + $0x68] sm:$0xff]
    %v516 = vld [vmem:[#allocation7 + $0x70] sm:$0xff]
    %v517 = vld [vmem:[#allocation7 + $0x78] sm:$0xff]
    %v518 = vld [vmem:[%s4] sm:$0x1]
    %v520 = vlaneseq
    %v521 = vshrl.u32 %v520, 7
    %v522 = vsub.s32 0, %v521
    %v523 = vrot.slane %v518, %v522
    %525 = vmatprep.subr.mxu0 0.0
    %526 = vmatpush1.msra.mxu0 %v502
    %527 = vmatprep.subr.mxu0 0.0
    %528 = vmatpush1.msra.mxu0 %v503
    %529 = vmatprep.subr.mxu0 0.0
    %530 = vmatpush1.msra.mxu0 %v504
    %531 = vmatprep.subr.mxu0 0.0
    %532 = vmatpush1.msra.mxu0 %v505
    %533 = vmatprep.subr.mxu0 0.0
    %534 = vmatpush1.msra.mxu0 %v506
    %535 = vmatprep.subr.mxu0 0.0
    %536 = vmatpush1.msra.mxu0 %v507
    %537 = vmatprep.subr.mxu0 0.0
    %538 = vmatpush1.msra.mxu0 %v508
    %539 = vmatprep.subr.mxu0 0.0
    %540 = vmatpush1.msra.mxu0 %v509
    %541 = vmatprep.subr.mxu0 0.0
    %542 = vmatpush1.msra.mxu0 %v510
    %543 = vmatprep.subr.mxu0 0.0
    %544 = vmatpush1.msra.mxu0 %v511
    %545 = vmatprep.subr.mxu0 0.0
    %546 = vmatpush1.msra.mxu0 %v512
    %547 = vmatprep.subr.mxu0 0.0
    %548 = vmatpush1.msra.mxu0 %v513
    %549 = vmatprep.subr.mxu0 0.0
    %550 = vmatpush1.msra.mxu0 %v514
    %551 = vmatprep.subr.mxu0 0.0
    %552 = vmatpush1.msra.mxu0 %v515
    %553 = vmatprep.subr.mxu0 0.0
    %554 = vmatpush1.msra.mxu0 %v516
    %555 = vmatprep.subr.mxu0 0.0
    %556 = vmatpush1.msra.mxu0 %v517
    %557 = vmatprep.subr.mxu0 0.0
    %558 = vmatpush1.msra.mxu0 0.0
    %559 = vmatprep.subr.mxu0 0.0
    %560 = vmatpush1.msra.mxu0 0.0
    %561 = vmatprep.subr.mxu0 0.0
    %562 = vmatpush1.msra.mxu0 0.0
    %563 = vmatprep.subr.mxu0 0.0
    %564 = vmatpush1.msra.mxu0 0.0
    %565 = vmatprep.subr.mxu0 0.0
    %566 = vmatpush1.msra.mxu0 0.0
    %567 = vmatprep.subr.mxu0 0.0
    %568 = vmatpush1.msra.mxu0 0.0
    %569 = vmatprep.subr.mxu0 0.0
    %570 = vmatpush1.msra.mxu0 0.0
    %571 = vmatprep.subr.mxu0 0.0
    %572 = vmatpush1.msra.mxu0 0.0
    %573 = vmatprep.subr.mxu0 0.0
    %574 = vmatpush1.msra.mxu0 0.0
    %575 = vmatprep.subr.mxu0 0.0
    %576 = vmatpush1.msra.mxu0 0.0
    %577 = vmatprep.subr.mxu0 0.0
    %578 = vmatpush1.msra.mxu0 0.0
    %579 = vmatprep.subr.mxu0 0.0
    %580 = vmatpush1.msra.mxu0 0.0
    %581 = vmatprep.subr.mxu0 0.0
    %582 = vmatpush1.msra.mxu0 0.0
    %583 = vmatprep.subr.mxu0 0.0
    %584 = vmatpush1.msra.mxu0 0.0
    %585 = vmatprep.subr.mxu0 0.0
    %586 = vmatpush1.msra.mxu0 0.0
    %587 = vmatprep.subr.mxu0 0.0
    %588 = vmatpush1.msra.mxu0 0.0
    %589 = vmatprep.mubr.f32.mxu0 0.0
    %590 = vmatmul.mubr.f32.gmra.mrb[0].mxu0 %v470
    %v591 = vpop.f32.mrb[0].mxu0
    %v592 = vadd.f32 %v523, %v591
    %v593 = vpop.f32.mrb[0].mxu0
    %594 = vmatprep.mubr.f32.mxu0 0.0
    %595 = vmatmul.mubr.f32.gmra.mrb[0].mxu0 %v471
    %v596 = vpop.f32.mrb[0].mxu0
    %v597 = vadd.f32 %v523, %v596
    %v598 = vpop.f32.mrb[0].mxu0
    %599 = vmatprep.mubr.f32.mxu0 0.0
    %600 = vmatmul.mubr.f32.gmra.mrb[0].mxu0 %v472
    %v601 = vpop.f32.mrb[0].mxu0
    %v602 = vadd.f32 %v523, %v601
    %v603 = vpop.f32.mrb[0].mxu0
    %604 = vmatprep.mubr.f32.mxu0 0.0
    %605 = vmatmul.mubr.f32.gmra.mrb[0].mxu0 %v473
    %v606 = vpop.f32.mrb[0].mxu0
    %v607 = vadd.f32 %v523, %v606
    %v608 = vpop.f32.mrb[0].mxu0
    %609 = vmatprep.mubr.f32.mxu0 0.0
    %610 = vmatmul.mubr.f32.gmra.mrb[0].mxu0 %v474
    %v611 = vpop.f32.mrb[0].mxu0
    %v612 = vadd.f32 %v523, %v611
    %v613 = vpop.f32.mrb[0].mxu0
    %614 = vmatprep.mubr.f32.mxu0 0.0
    %615 = vmatmul.mubr.f32.gmra.mrb[0].mxu0 %v475
    %v616 = vpop.f32.mrb[0].mxu0
    %v617 = vadd.f32 %v523, %v616
    %v618 = vpop.f32.mrb[0].mxu0
    %619 = vmatprep.mubr.f32.mxu0 0.0
    %620 = vmatmul.mubr.f32.gmra.mrb[0].mxu0 %v476
    %v621 = vpop.f32.mrb[0].mxu0
    %v622 = vadd.f32 %v523, %v621
    %v623 = vpop.f32.mrb[0].mxu0
    %624 = vmatprep.mubr.f32.mxu0 0.0
    %625 = vmatmul.mubr.f32.gmra.mrb[0].mxu0 %v477
    %v626 = vpop.f32.mrb[0].mxu0
    %v627 = vadd.f32 %v523, %v626
    %v628 = vpop.f32.mrb[0].mxu0
    %629 = vmatprep.mubr.f32.mxu0 0.0
    %630 = vmatmul.mubr.f32.gmra.mrb[0].mxu0 %v478
    %v631 = vpop.f32.mrb[0].mxu0
    %v632 = vadd.f32 %v523, %v631
    %v633 = vpop.f32.mrb[0].mxu0
    %634 = vmatprep.mubr.f32.mxu0 0.0
    %635 = vmatmul.mubr.f32.gmra.mrb[0].mxu0 %v479
    %v636 = vpop.f32.mrb[0].mxu0
    %v637 = vadd.f32 %v523, %v636
    %v638 = vpop.f32.mrb[0].mxu0
    %639 = vmatprep.mubr.f32.mxu0 0.0
    %640 = vmatmul.mubr.f32.gmra.mrb[0].mxu0 %v480
    %v641 = vpop.f32.mrb[0].mxu0
    %v642 = vadd.f32 %v523, %v641
    %v643 = vpop.f32.mrb[0].mxu0
    %644 = vmatprep.mubr.f32.mxu0 0.0
    %645 = vmatmul.mubr.f32.gmra.mrb[0].mxu0 %v481
    %v646 = vpop.f32.mrb[0].mxu0
    %v647 = vadd.f32 %v523, %v646
    %v648 = vpop.f32.mrb[0].mxu0
    %649 = vmatprep.mubr.f32.mxu0 0.0
    %650 = vmatmul.mubr.f32.gmra.mrb[0].mxu0 %v482
    %v651 = vpop.f32.mrb[0].mxu0
    %v652 = vadd.f32 %v523, %v651
    %v653 = vpop.f32.mrb[0].mxu0
    %654 = vmatprep.mubr.f32.mxu0 0.0
    %655 = vmatmul.mubr.f32.gmra.mrb[0].mxu0 %v483
    %v656 = vpop.f32.mrb[0].mxu0
    %v657 = vadd.f32 %v523, %v656
    %v658 = vpop.f32.mrb[0].mxu0
    %659 = vmatprep.mubr.f32.mxu0 0.0
    %660 = vmatmul.mubr.f32.gmra.mrb[0].mxu0 %v484
    %v661 = vpop.f32.mrb[0].mxu0
    %v662 = vadd.f32 %v523, %v661
    %v663 = vpop.f32.mrb[0].mxu0
    %664 = vmatprep.mubr.f32.mxu0 0.0
    %665 = vmatmul.mubr.f32.gmra.mrb[0].mxu0 %v485
    %v666 = vpop.f32.mrb[0].mxu0
    %v667 = vadd.f32 %v523, %v666
    %v668 = vpop.f32.mrb[0].mxu0
    %669 = vmatprep.mubr.f32.mxu0 0.0
    %670 = vmatmul.mubr.f32.gmra.mrb[0].mxu0 %v486
    %v671 = vpop.f32.mrb[0].mxu0
    %v672 = vadd.f32 %v523, %v671
    %v673 = vpop.f32.mrb[0].mxu0
    %674 = vmatprep.mubr.f32.mxu0 0.0
    %675 = vmatmul.mubr.f32.gmra.mrb[0].mxu0 %v487
    %v676 = vpop.f32.mrb[0].mxu0
    %v677 = vadd.f32 %v523, %v676
    %v678 = vpop.f32.mrb[0].mxu0
    %679 = vmatprep.mubr.f32.mxu0 0.0
    %680 = vmatmul.mubr.f32.gmra.mrb[0].mxu0 %v488
    %v681 = vpop.f32.mrb[0].mxu0
    %v682 = vadd.f32 %v523, %v681
    %v683 = vpop.f32.mrb[0].mxu0
    %684 = vmatprep.mubr.f32.mxu0 0.0
    %685 = vmatmul.mubr.f32.gmra.mrb[0].mxu0 %v489
    %v686 = vpop.f32.mrb[0].mxu0
    %v687 = vadd.f32 %v523, %v686
    %v688 = vpop.f32.mrb[0].mxu0
    %689 = vmatprep.mubr.f32.mxu0 0.0
    %690 = vmatmul.mubr.f32.gmra.mrb[0].mxu0 %v490
    %v691 = vpop.f32.mrb[0].mxu0
    %v692 = vadd.f32 %v523, %v691
    %v693 = vpop.f32.mrb[0].mxu0
    %694 = vmatprep.mubr.f32.mxu0 0.0
    %695 = vmatmul.mubr.f32.gmra.mrb[0].mxu0 %v491
    %v696 = vpop.f32.mrb[0].mxu0
    %v697 = vadd.f32 %v523, %v696
    %v698 = vpop.f32.mrb[0].mxu0
    %699 = vmatprep.mubr.f32.mxu0 0.0
    %700 = vmatmul.mubr.f32.gmra.mrb[0].mxu0 %v492
    %v701 = vpop.f32.mrb[0].mxu0
    %v702 = vadd.f32 %v523, %v701
    %v703 = vpop.f32.mrb[0].mxu0
    %704 = vmatprep.mubr.f32.mxu0 0.0
    %705 = vmatmul.mubr.f32.gmra.mrb[0].mxu0 %v493
    %v706 = vpop.f32.mrb[0].mxu0
    %v707 = vadd.f32 %v523, %v706
    %v708 = vpop.f32.mrb[0].mxu0
    %709 = vmatprep.mubr.f32.mxu0 0.0
    %710 = vmatmul.mubr.f32.gmra.mrb[0].mxu0 %v494
    %v711 = vpop.f32.mrb[0].mxu0
    %v712 = vadd.f32 %v523, %v711
    %v713 = vpop.f32.mrb[0].mxu0
    %714 = vmatprep.mubr.f32.mxu0 0.0
    %715 = vmatmul.mubr.f32.gmra.mrb[0].mxu0 %v495
    %v716 = vpop.f32.mrb[0].mxu0
    %v717 = vadd.f32 %v523, %v716
    %v718 = vpop.f32.mrb[0].mxu0
    %719 = vmatprep.mubr.f32.mxu0 0.0
    %720 = vmatmul.mubr.f32.gmra.mrb[0].mxu0 %v496
    %v721 = vpop.f32.mrb[0].mxu0
    %v722 = vadd.f32 %v523, %v721
    %v723 = vpop.f32.mrb[0].mxu0
    %724 = vmatprep.mubr.f32.mxu0 0.0
    %725 = vmatmul.mubr.f32.gmra.mrb[0].mxu0 %v497
    %v726 = vpop.f32.mrb[0].mxu0
    %v727 = vadd.f32 %v523, %v726
    %v728 = vpop.f32.mrb[0].mxu0
    %729 = vmatprep.mubr.f32.mxu0 0.0
    %730 = vmatmul.mubr.f32.gmra.mrb[0].mxu0 %v498
    %v731 = vpop.f32.mrb[0].mxu0
    %v732 = vadd.f32 %v523, %v731
    %v733 = vpop.f32.mrb[0].mxu0
    %734 = vmatprep.mubr.f32.mxu0 0.0
    %735 = vmatmul.mubr.f32.gmra.mrb[0].mxu0 %v499
    %v736 = vpop.f32.mrb[0].mxu0
    %v737 = vadd.f32 %v523, %v736
    %v738 = vpop.f32.mrb[0].mxu0
    %739 = vmatprep.mubr.f32.mxu0 0.0
    %740 = vmatmul.mubr.f32.gmra.mrb[0].mxu0 %v500
    %v741 = vpop.f32.mrb[0].mxu0
    %v742 = vadd.f32 %v523, %v741
    %v743 = vpop.f32.mrb[0].mxu0
    %744 = vmatprep.mubr.f32.mxu0 0.0
    %745 = vmatmul.mubr.f32.gmra.mrb[0].mxu0 %v501
    %v746 = vpop.f32.mrb[0].mxu0
    %v747 = vadd.f32 %v523, %v746
    %v748 = vpop.f32.mrb[0].mxu0
    %749 = vdwg.mxu0
    %750 = vst [vmem:[#allocation8] sm:$0xff] %v592
    %751 = vst [vmem:[#allocation8 + $0x8] sm:$0xff] %v597
    %752 = vst [vmem:[#allocation8 + $0x10] sm:$0xff] %v602
    %753 = vst [vmem:[#allocation8 + $0x18] sm:$0xff] %v607
    %754 = vst [vmem:[#allocation8 + $0x20] sm:$0xff] %v612
    %755 = vst [vmem:[#allocation8 + $0x28] sm:$0xff] %v617
    %756 = vst [vmem:[#allocation8 + $0x30] sm:$0xff] %v622
    %757 = vst [vmem:[#allocation8 + $0x38] sm:$0xff] %v627
    %758 = vst [vmem:[#allocation8 + $0x40] sm:$0xff] %v632
    %759 = vst [vmem:[#allocation8 + $0x48] sm:$0xff] %v637
    %760 = vst [vmem:[#allocation8 + $0x50] sm:$0xff] %v642
    %761 = vst [vmem:[#allocation8 + $0x58] sm:$0xff] %v647
    %762 = vst [vmem:[#allocation8 + $0x60] sm:$0xff] %v652
    %763 = vst [vmem:[#allocation8 + $0x68] sm:$0xff] %v657
    %764 = vst [vmem:[#allocation8 + $0x70] sm:$0xff] %v662
    %765 = vst [vmem:[#allocation8 + $0x78] sm:$0xff] %v667
    %766 = vst [vmem:[#allocation8 + $0x80] sm:$0xff] %v672
    %767 = vst [vmem:[#allocation8 + $0x88] sm:$0xff] %v677
    %768 = vst [vmem:[#allocation8 + $0x90] sm:$0xff] %v682
    %769 = vst [vmem:[#allocation8 + $0x98] sm:$0xff] %v687
    %770 = vst [vmem:[#allocation8 + $0xa0] sm:$0xff] %v692
    %771 = vst [vmem:[#allocation8 + $0xa8] sm:$0xff] %v697
    %772 = vst [vmem:[#allocation8 + $0xb0] sm:$0xff] %v702
    %773 = vst [vmem:[#allocation8 + $0xb8] sm:$0xff] %v707
    %774 = vst [vmem:[#allocation8 + $0xc0] sm:$0xff] %v712
    %775 = vst [vmem:[#allocation8 + $0xc8] sm:$0xff] %v717
    %776 = vst [vmem:[#allocation8 + $0xd0] sm:$0xff] %v722
    %777 = vst [vmem:[#allocation8 + $0xd8] sm:$0xff] %v727
    %778 = vst [vmem:[#allocation8 + $0xe0] sm:$0xff] %v732
    %779 = vst [vmem:[#allocation8 + $0xe8] sm:$0xff] %v737
    %780 = vst [vmem:[#allocation8 + $0xf0] sm:$0xff] %v742
    %781 = vst [vmem:[#allocation8 + $0xf8] sm:$0xff] %v747
    // Predicated region
    $region34: #{tpu_custom_call.1} parent=1 // pred_check
      _
    $region35: #{tpu_custom_call.1} parent=1 // pred_check_branch
      %783 = sbr.rel (0) target = $region37
    $region36: #{tpu_custom_call.1} parent=1 // pred_region
      %s785 = ssub.s32 4096, 4096
      %786 = vsyncadd [#allocation4], %s785
      %s787 = sshll.u32 [#allocation8], 4
      %s788 = int_to_ptr.vmem [resolvable:$true] %s787
      %793 = dma.vmem_to_hbm [thread:$0]  %s788, 4096, %s5, [#allocation4], 128, 128, 8
    $region37: #{tpu_custom_call.1} parent=1 // pred_fallthru
      _
    // Predicated region
    $region38: #{tpu_custom_call.1} parent=1 // pred_check
      _
    $region39: #{tpu_custom_call.1} parent=1 // pred_check_branch
      %795 = sbr.rel (0) target = $region41
    $region40: #{tpu_custom_call.1} parent=1 // pred_region
      %796 = dma.done [#allocation4], 4096
    $region41: #{tpu_custom_call.1} parent=1 // pred_fallthru
      _
    %797 = vsyncpa [#allocation3], 1
    %798 = vsyncpa [#allocation6], 1
    %799 = vsyncpa [#allocation4], 1

</llo_original>
